<compile_context>
chip_gen: v5e
topology: v5e:2x2
jax: 0.10.0
libtpu: 0.0.40
codegen_flags: <defaults>
</compile_context>

<pallas_src>
import functools

import jax
import jax.numpy as jnp
from jax.experimental import pallas as pl
from jax.experimental.pallas import tpu as pltpu


# ----------------------------- helpers (plain JAX glue) ----------------------

def normalize_adj(A):
    """A_norm = D^{-1/2} (A + I) D^{-1/2} (preprocessing, plain JAX)."""
    I = jnp.eye(A.shape[0], dtype=A.dtype)
    A_hat = A + I
    D = jnp.sum(A_hat, axis=1)
    D_inv_sqrt = jnp.diag(jnp.power(D, -0.5))
    return D_inv_sqrt @ A_hat @ D_inv_sqrt


def xavier_uniform(key, shape, dtype=jnp.float32):
    """Xavier/Glorot uniform init (matches nn.init.xavier_uniform_)."""
    fan_in, fan_out = shape
    bound = jnp.sqrt(6.0 / (fan_in + fan_out))
    return jax.random.uniform(key, shape, dtype=dtype, minval=-bound, maxval=bound)


def _round_up(n, m):
    return ((n + m - 1) // m) * m


def _pick_tile(n, candidates):
    for t in candidates:
        if n >= t and n % t == 0:
            return t
    return n


# ----------------------------- kernels ---------------------------------------

def _support_kernel(x_ref, w_ref, s_ref):
    # support = x @ W  (bf16 MXU operands, f32 accumulate, bf16 writeback)
    s_ref[...] = jnp.dot(
        x_ref[...], w_ref[...], preferred_element_type=jnp.float32
    ).astype(s_ref.dtype)


def _aggregate_kernel(a_ref, s_ref, o_ref, acc_ref):
    # out[i-strip] = sum_k A[i-strip, k-strip] @ support[k-strip]
    k = pl.program_id(1)

    @pl.when(k == 0)
    def _():
        acc_ref[...] = jnp.zeros_like(acc_ref)

    acc_ref[...] += jnp.dot(
        a_ref[...], s_ref[...], preferred_element_type=jnp.float32
    )

    @pl.when(k == pl.num_programs(1) - 1)
    def _():
        o_ref[...] = acc_ref[...].astype(o_ref.dtype)


# ----------------------------- wrapper ----------------------------------------

@functools.partial(jax.jit)
def gcn_layer(x, A_norm, weight):
    """Fused GCN layer forward: A_norm @ (x @ weight), f32 result."""
    N, F_in = x.shape
    F_out = weight.shape[1]
    assert A_norm.shape == (N, N)
    assert weight.shape == (F_in, F_out)

    # Lane-dense padding: features padded to 128, N padded to a multiple of 128
    # (zero padding does not change the valid region of the result).
    N_pad = _round_up(N, 128)
    Fi_pad = _round_up(F_in, 128)
    Fo_pad = _round_up(F_out, 128)

    bf16 = jnp.bfloat16
    a_p = jnp.zeros((N_pad, N_pad), bf16).at[:N, :N].set(A_norm.astype(bf16))
    x_p = jnp.zeros((N_pad, Fi_pad), bf16).at[:N, :F_in].set(x.astype(bf16))
    w_p = jnp.zeros((Fi_pad, Fo_pad), bf16).at[:F_in, :F_out].set(weight.astype(bf16))

    vmem_limit = 32 * 1024 * 1024  # safe on v5e/v6e (128 MiB) and v7x (64 MiB)

    # ---- stage 1: support = x @ W (tiny vs. the N x N aggregation) ----------
    tm_s = _pick_tile(N_pad, (512, 256, 128))
    support = pl.pallas_call(
        _support_kernel,
        out_shape=jax.ShapeDtypeStruct((N_pad, Fo_pad), bf16),
        grid_spec=pltpu.PrefetchScalarGridSpec(
            num_scalar_prefetch=0,
            grid=(N_pad // tm_s,),
            in_specs=[
                pl.BlockSpec((tm_s, Fi_pad), lambda i: (i, 0)),
                pl.BlockSpec((Fi_pad, Fo_pad), lambda i: (0, 0)),  # W resident
            ],
            out_specs=pl.BlockSpec((tm_s, Fo_pad), lambda i: (i, 0)),
        ),
        compiler_params=pltpu.CompilerParams(
            dimension_semantics=("parallel",),
            vmem_limit_bytes=vmem_limit,
        ),
        cost_estimate=pl.CostEstimate(
            flops=2 * N_pad * Fi_pad * Fo_pad,
            transcendentals=0,
            bytes_accessed=2 * (N_pad * Fi_pad + Fi_pad * Fo_pad + N_pad * Fo_pad),
        ),
    )(x_p, w_p)

    # ---- stage 2: out = A_norm @ support, tiled (rows x contraction) --------
    tm = _pick_tile(N_pad, (512, 256, 128))
    tk = _pick_tile(N_pad, (2048, 1024, 512, 256, 128))
    grid = (N_pad // tm, N_pad // tk)

    out_p = pl.pallas_call(
        _aggregate_kernel,
        out_shape=jax.ShapeDtypeStruct((N_pad, Fo_pad), jnp.float32),
        grid_spec=pltpu.PrefetchScalarGridSpec(
            num_scalar_prefetch=0,
            grid=grid,
            in_specs=[
                pl.BlockSpec((tm, tk), lambda i, k: (i, k)),        # A tile
                pl.BlockSpec((tk, Fo_pad), lambda i, k: (k, 0)),    # support slice
            ],
            out_specs=pl.BlockSpec((tm, Fo_pad), lambda i, k: (i, 0)),
            scratch_shapes=[pltpu.VMEM((tm, Fo_pad), jnp.float32)],  # f32 accumulator
        ),
        compiler_params=pltpu.CompilerParams(
            # rows: independent -> parallel (megacore); k: reduction -> arbitrary
            dimension_semantics=("parallel", "arbitrary"),
            vmem_limit_bytes=vmem_limit,
        ),
        cost_estimate=pl.CostEstimate(
            flops=2 * N_pad * N_pad * Fo_pad,
            transcendentals=0,
            bytes_accessed=(
                2 * N_pad * N_pad                       # A (bf16)
                + 2 * grid[0] * N_pad * Fo_pad          # support re-read per row strip
                + 4 * N_pad * Fo_pad                    # f32 output
            ),
        ),
    )(a_p, support)

    return out_p[:N, :F_out]


# ----------------------------- test -------------------------------------------

if __name__ == "__main__":
    key = jax.random.PRNGKey(0)
    k_adj, k_x, k_w = jax.random.split(key, 3)

    N = 64        # number of graph nodes
    F_in = 32     # in_features
    F_out = 16    # out_features

    # Random symmetric 0/1 adjacency (no self loops; normalize_adj adds I).
    raw = jax.random.uniform(k_adj, (N, N))
    A = (raw + raw.T > 1.0).astype(jnp.float32)
    A = A * (1.0 - jnp.eye(N, dtype=jnp.float32))
    A_norm = normalize_adj(A)

    x = jax.random.normal(k_x, (N, F_in), dtype=jnp.float32)
    weight = xavier_uniform(k_w, (F_in, F_out))

    out = gcn_layer(x, A_norm, weight)
    out = jax.block_until_ready(out)
    assert out.shape == (N, F_out)

    # Reference faithful to the kernel's numerics: bf16 operands, f32 accumulate,
    # bf16 intermediate `support` (same as the kernel), computed at full precision.
    hp = jax.lax.Precision.HIGHEST
    xb = x.astype(jnp.bfloat16).astype(jnp.float32)
    wb = weight.astype(jnp.bfloat16).astype(jnp.float32)
    ab = A_norm.astype(jnp.bfloat16).astype(jnp.float32)
    support_ref = jnp.dot(xb, wb, precision=hp).astype(jnp.bfloat16).astype(jnp.float32)
    ref = jnp.dot(ab, support_ref, precision=hp)
    assert jnp.allclose(out, ref, atol=1e-3, rtol=1e-3), "mismatch vs reference"

    print("KERNEL_OK")
</pallas_src>

<mosaic_0001>
module attributes {stable_mosaic.version = 11 : i64} {
  func.func @_support_kernel(%arg0: i32, %arg1: memref<128x128xbf16, #tpu.memory_space<vmem>>, %arg2: memref<128x128xbf16, #tpu.memory_space<vmem>>, %arg3: memref<128x128xbf16, #tpu.memory_space<vmem>>) attributes {dimension_semantics = [#tpu.dimension_semantics<parallel>], iteration_bounds = array<i64: 1>, scalar_prefetch = 0 : i64, scratch_operands = 0 : i64, tpu.core_type = #tpu.core_type<tc>, window_params = [{transform_indices = @transform_0, window_bounds = array<i64: 128, 128>}, {pipeline_mode = #tpu.pipeline_mode<synchronous>, transform_indices = @transform_1, window_bounds = array<i64: 128, 128>}, {transform_indices = @transform_2, window_bounds = array<i64: 128, 128>}]} {
    %c0 = arith.constant 0 : index
    %c0_0 = arith.constant 0 : index
    %0 = vector.load %arg1[%c0, %c0_0] : memref<128x128xbf16, #tpu.memory_space<vmem>>, vector<128x128xbf16>
    %c0_1 = arith.constant 0 : index
    %c0_2 = arith.constant 0 : index
    %1 = vector.load %arg2[%c0_1, %c0_2] : memref<128x128xbf16, #tpu.memory_space<vmem>>, vector<128x128xbf16>
    %cst = arith.constant dense<0.000000e+00> : vector<128x128xf32>
    %2 = tpu.matmul %0, %1, %cst {dimension_numbers = #tpu.dot_dimension_numbers<[1], [0], [0], [1], [0, 0, 1, 1], [], []>} : vector<128x128xbf16>, vector<128x128xbf16>, vector<128x128xf32> -> vector<128x128xf32>
    %3 = arith.truncf %2 : vector<128x128xf32> to vector<128x128xbf16>
    %c0_3 = arith.constant 0 : index
    %c0_4 = arith.constant 0 : index
    %4 = vector.load %arg3[%c0_3, %c0_4] : memref<128x128xbf16, #tpu.memory_space<vmem>>, vector<128x128xbf16>
    tpu.vector_store %arg3[%c0_3, %c0_4], %3 {strides = array<i32>} : memref<128x128xbf16, #tpu.memory_space<vmem>>, vector<128x128xbf16>,
    return
  }
  func.func @transform_0(%arg0: i32) -> (i32, i32) {
    %c0_i32 = arith.constant 0 : i32
    %c0_i32_0 = arith.constant 0 : i32
    return %arg0, %c0_i32 : i32, i32
  }
  func.func @transform_1(%arg0: i32) -> (i32, i32) {
    %c0_i32 = arith.constant 0 : i32
    %c0_i32_0 = arith.constant 0 : i32
    %c0_i32_1 = arith.constant 0 : i32
    return %c0_i32, %c0_i32_0 : i32, i32
  }
  func.func @transform_2(%arg0: i32) -> (i32, i32) {
    %c0_i32 = arith.constant 0 : i32
    %c0_i32_0 = arith.constant 0 : i32
    return %arg0, %c0_i32 : i32, i32
  }
}

module attributes {stable_mosaic.version = 11 : i64} {
  func.func @_aggregate_kernel(%arg0: i32, %arg1: i32, %arg2: memref<128x128xbf16, #tpu.memory_space<vmem>>, %arg3: memref<128x128xbf16, #tpu.memory_space<vmem>>, %arg4: memref<128x128xf32, #tpu.memory_space<vmem>>, %arg5: memref<128x128xf32, #tpu.memory_space<vmem>>) attributes {dimension_semantics = [#tpu.dimension_semantics<parallel>, #tpu.dimension_semantics<arbitrary>], iteration_bounds = array<i64: 1, 1>, scalar_prefetch = 0 : i64, scratch_operands = 1 : i64, tpu.core_type = #tpu.core_type<tc>, window_params = [{transform_indices = @transform_0, window_bounds = array<i64: 128, 128>}, {transform_indices = @transform_1, window_bounds = array<i64: 128, 128>}, {transform_indices = @transform_2, window_bounds = array<i64: 128, 128>}]} {
    %c0_i32 = arith.constant 0 : i32
    %0 = arith.cmpi eq, %arg1, %c0_i32 : i32
    %1 = arith.extui %0 : i1 to i32
    %c0_i32_0 = arith.constant 0 : i32
    %2 = arith.cmpi ne, %1, %c0_i32_0 : i32
    scf.if %2 {
      %cst_10 = arith.constant 0.000000e+00 : f32
      %12 = vector.broadcast %cst_10 : f32 to vector<128x128xf32>
      %c0_11 = arith.constant 0 : index
      %c0_12 = arith.constant 0 : index
      %13 = vector.load %arg5[%c0_11, %c0_12] : memref<128x128xf32, #tpu.memory_space<vmem>>, vector<128x128xf32>
      tpu.vector_store %arg5[%c0_11, %c0_12], %12 {strides = array<i32>} : memref<128x128xf32, #tpu.memory_space<vmem>>, vector<128x128xf32>,
    } else {
    }
    %c0 = arith.constant 0 : index
    %c0_1 = arith.constant 0 : index
    %3 = vector.load %arg5[%c0, %c0_1] : memref<128x128xf32, #tpu.memory_space<vmem>>, vector<128x128xf32>
    %c0_2 = arith.constant 0 : index
    %c0_3 = arith.constant 0 : index
    %4 = vector.load %arg2[%c0_2, %c0_3] : memref<128x128xbf16, #tpu.memory_space<vmem>>, vector<128x128xbf16>
    %c0_4 = arith.constant 0 : index
    %c0_5 = arith.constant 0 : index
    %5 = vector.load %arg3[%c0_4, %c0_5] : memref<128x128xbf16, #tpu.memory_space<vmem>>, vector<128x128xbf16>
    %cst = arith.constant dense<0.000000e+00> : vector<128x128xf32>
    %6 = tpu.matmul %4, %5, %cst {dimension_numbers = #tpu.dot_dimension_numbers<[1], [0], [0], [1], [0, 0, 1, 1], [], []>} : vector<128x128xbf16>, vector<128x128xbf16>, vector<128x128xf32> -> vector<128x128xf32>
    %7 = arith.addf %3, %6 : vector<128x128xf32>
    %c0_6 = arith.constant 0 : index
    %c0_7 = arith.constant 0 : index
    %8 = vector.load %arg5[%c0_6, %c0_7] : memref<128x128xf32, #tpu.memory_space<vmem>>, vector<128x128xf32>
    tpu.vector_store %arg5[%c0_6, %c0_7], %7 {strides = array<i32>} : memref<128x128xf32, #tpu.memory_space<vmem>>, vector<128x128xf32>,
    %c0_i32_8 = arith.constant 0 : i32
    %9 = arith.cmpi eq, %arg1, %c0_i32_8 : i32
    %10 = arith.extui %9 : i1 to i32
    %c0_i32_9 = arith.constant 0 : i32
    %11 = arith.cmpi ne, %10, %c0_i32_9 : i32
    scf.if %11 {
      %c0_10 = arith.constant 0 : index
      %c0_11 = arith.constant 0 : index
      %12 = vector.load %arg5[%c0_10, %c0_11] : memref<128x128xf32, #tpu.memory_space<vmem>>, vector<128x128xf32>
      %c0_12 = arith.constant 0 : index
      %c0_13 = arith.constant 0 : index
      %13 = vector.load %arg4[%c0_12, %c0_13] : memref<128x128xf32, #tpu.memory_space<vmem>>, vector<128x128xf32>
      tpu.vector_store %arg4[%c0_12, %c0_13], %12 {strides = array<i32>} : memref<128x128xf32, #tpu.memory_space<vmem>>, vector<128x128xf32>,
    } else {
    }
    return
  }
  func.func @transform_0(%arg0: i32, %arg1: i32) -> (i32, i32) {
    %c0_i32 = arith.constant 0 : i32
    return %arg0, %arg1 : i32, i32
  }
  func.func @transform_1(%arg0: i32, %arg1: i32) -> (i32, i32) {
    %c0_i32 = arith.constant 0 : i32
    %c0_i32_0 = arith.constant 0 : i32
    return %arg1, %c0_i32 : i32, i32
  }
  func.func @transform_2(%arg0: i32, %arg1: i32) -> (i32, i32) {
    %c0_i32 = arith.constant 0 : i32
    %c0_i32_0 = arith.constant 0 : i32
    return %arg0, %c0_i32 : i32, i32
  }
}

</mosaic_0001>

<llo_original>
// kernel: gcn_layer.2
$region0: #{gcn_layer.2}
  #allocation0 [shape = 'u32[]', space=smem, size = 0x4, offset = 0x4, fixed_abs, tag = 'smem constant byte address 0x4 - core index']
  #allocation1 [shape = 'u32[72,128]{1,0:T(1,128)}', space=vmem, size = 0x9000, scoped, tag = 'internal scratch']
  %s0 = inlined_call_operand.vmem [shape: bf16[128,128], index: 0, kind: input, shape index: {}]
  %s1 = inlined_call_operand.vmem [shape: bf16[128,128], index: 1, kind: input, shape index: {}]
  %s2 = inlined_call_operand.vmem [shape: bf16[128,128], index: 2, kind: output, shape index: {}]
  %s3 = sld [smem:[#allocation0]]
  $region18: #{gcn_layer.2} parent=0
    _
  %s5 = ssub.s32 1, %s3
  %s6 = scalar_select 0, %s5, %s3
  // Predicated region
  $region2: #{gcn_layer.2} parent=0 // pred_check
    _
  $region3: #{gcn_layer.2} parent=0 // pred_check_branch
    %8 = sbr.rel (0) target = $region5
  $region4: #{gcn_layer.2} parent=0 // pred_region
    _
  $region5: #{gcn_layer.2} parent=0 // pred_fallthru
    _
  // Predicated region
  $region6: #{gcn_layer.2} parent=0 // pred_check
    _
  $region7: #{gcn_layer.2} parent=0 // pred_check_branch
    %10 = sbr.rel (0) target = $region9
  $region8: #{gcn_layer.2} parent=0 // pred_region
    _
  $region9: #{gcn_layer.2} parent=0 // pred_fallthru
    _
  %v11 = vld [vmem:[%s0] sm:$0xf]
  %v12 = vld [vmem:[%s0 + $0x4] sm:$0xf]
  %v13 = vld [vmem:[%s0 + $0x8] sm:$0xf]
  %v14 = vld [vmem:[%s0 + $0xc] sm:$0xf]
  %v15 = vld [vmem:[%s0 + $0x10] sm:$0xf]
  %v16 = vld [vmem:[%s0 + $0x14] sm:$0xf]
  %v17 = vld [vmem:[%s0 + $0x18] sm:$0xf]
  %v18 = vld [vmem:[%s0 + $0x1c] sm:$0xf]
  %v19 = vld [vmem:[%s0 + $0x20] sm:$0xf]
  %v20 = vld [vmem:[%s0 + $0x24] sm:$0xf]
  %v21 = vld [vmem:[%s0 + $0x28] sm:$0xf]
  %v22 = vld [vmem:[%s0 + $0x2c] sm:$0xf]
  %v23 = vld [vmem:[%s0 + $0x30] sm:$0xf]
  %v24 = vld [vmem:[%s0 + $0x34] sm:$0xf]
  %v25 = vld [vmem:[%s0 + $0x38] sm:$0xf]
  %v26 = vld [vmem:[%s0 + $0x3c] sm:$0xf]
  %v27 = vld [vmem:[%s1] sm:$0xf]
  %v28 = vld [vmem:[%s1 + $0x4] sm:$0xf]
  %v29 = vld [vmem:[%s1 + $0x8] sm:$0xf]
  %v30 = vld [vmem:[%s1 + $0xc] sm:$0xf]
  %v31 = vld [vmem:[%s1 + $0x10] sm:$0xf]
  %v32 = vld [vmem:[%s1 + $0x14] sm:$0xf]
  %v33 = vld [vmem:[%s1 + $0x18] sm:$0xf]
  %v34 = vld [vmem:[%s1 + $0x1c] sm:$0xf]
  %v35 = vld [vmem:[%s1 + $0x20] sm:$0xf]
  %v36 = vld [vmem:[%s1 + $0x24] sm:$0xf]
  %v37 = vld [vmem:[%s1 + $0x28] sm:$0xf]
  %v38 = vld [vmem:[%s1 + $0x2c] sm:$0xf]
  %v39 = vld [vmem:[%s1 + $0x30] sm:$0xf]
  %v40 = vld [vmem:[%s1 + $0x34] sm:$0xf]
  %v41 = vld [vmem:[%s1 + $0x38] sm:$0xf]
  %v42 = vld [vmem:[%s1 + $0x3c] sm:$0xf]
  %v59 = vunpack.c.l.b16 %v11
  %v60 = vunpack.c.l.b16 %v12
  %v61 = vunpack.c.l.b16 %v13
  %v62 = vunpack.c.l.b16 %v14
  %v63 = vunpack.c.l.b16 %v15
  %v64 = vunpack.c.l.b16 %v16
  %v65 = vunpack.c.l.b16 %v17
  %v66 = vunpack.c.l.b16 %v18
  %v67 = vunpack.c.l.b16 %v19
  %v68 = vunpack.c.l.b16 %v20
  %v69 = vunpack.c.l.b16 %v21
  %v70 = vunpack.c.l.b16 %v22
  %v71 = vunpack.c.l.b16 %v23
  %v72 = vunpack.c.l.b16 %v24
  %v73 = vunpack.c.l.b16 %v25
  %v74 = vunpack.c.l.b16 %v26
  %v75 = vpack.c.b16 %v60, %v59
  %v76 = vpack.c.b16 %v62, %v61
  %v77 = vpack.c.b16 %v64, %v63
  %v78 = vpack.c.b16 %v66, %v65
  %v79 = vpack.c.b16 %v68, %v67
  %v80 = vpack.c.b16 %v70, %v69
  %v81 = vpack.c.b16 %v72, %v71
  %v82 = vpack.c.b16 %v74, %v73
  %v107 = vunpack.c.l.b16 %v27
  %v108 = vunpack.c.l.b16 %v28
  %v109 = vunpack.c.l.b16 %v29
  %v110 = vunpack.c.l.b16 %v30
  %v111 = vunpack.c.l.b16 %v31
  %v112 = vunpack.c.l.b16 %v32
  %v113 = vunpack.c.l.b16 %v33
  %v114 = vunpack.c.l.b16 %v34
  %v115 = vunpack.c.l.b16 %v35
  %v116 = vunpack.c.l.b16 %v36
  %v117 = vunpack.c.l.b16 %v37
  %v118 = vunpack.c.l.b16 %v38
  %v119 = vunpack.c.l.b16 %v39
  %v120 = vunpack.c.l.b16 %v40
  %v121 = vunpack.c.l.b16 %v41
  %v122 = vunpack.c.l.b16 %v42
  %v123 = vpack.c.b16 %v108, %v107
  %v124 = vpack.c.b16 %v110, %v109
  %v125 = vpack.c.b16 %v112, %v111
  %v126 = vpack.c.b16 %v114, %v113
  %v127 = vpack.c.b16 %v116, %v115
  %v128 = vpack.c.b16 %v118, %v117
  %v129 = vpack.c.b16 %v120, %v119
  %v130 = vpack.c.b16 %v122, %v121
  %139 = vmatpush.bf16.msra.mxu0 %v130
  %140 = vmatpush.bf16.msra.mxu0 %v129
  %141 = vmatpush.bf16.msra.mxu0 %v128
  %142 = vmatpush.bf16.msra.mxu0 %v127
  %143 = vmatpush.bf16.msra.mxu0 %v126
  %144 = vmatpush.bf16.msra.mxu0 %v125
  %145 = vmatpush.bf16.msra.mxu0 %v124
  %146 = vmatpush.bf16.msra.mxu0 %v123
  %147 = vmatmul.bf16.gmra.mxu0 %v75
  %v148 = vpop.f32.mrf.mxu0
  %v149 = vadd.f32 0.0, %v148
  %v150 = vpop.f32.mrf.mxu0
  %v151 = vadd.f32 0.0, %v150
  %152 = vmatmul.bf16.gmra.mxu0 %v76
  %v153 = vpop.f32.mrf.mxu0
  %v154 = vadd.f32 0.0, %v153
  %v155 = vpop.f32.mrf.mxu0
  %v156 = vadd.f32 0.0, %v155
  %157 = vmatmul.bf16.gmra.mxu0 %v77
  %v158 = vpop.f32.mrf.mxu0
  %v159 = vadd.f32 0.0, %v158
  %v160 = vpop.f32.mrf.mxu0
  %v161 = vadd.f32 0.0, %v160
  %162 = vmatmul.bf16.gmra.mxu0 %v78
  %v163 = vpop.f32.mrf.mxu0
  %v164 = vadd.f32 0.0, %v163
  %v165 = vpop.f32.mrf.mxu0
  %v166 = vadd.f32 0.0, %v165
  %167 = vmatmul.bf16.gmra.mxu0 %v79
  %v168 = vpop.f32.mrf.mxu0
  %v169 = vadd.f32 0.0, %v168
  %v170 = vpop.f32.mrf.mxu0
  %v171 = vadd.f32 0.0, %v170
  %172 = vmatmul.bf16.gmra.mxu0 %v80
  %v173 = vpop.f32.mrf.mxu0
  %v174 = vadd.f32 0.0, %v173
  %v175 = vpop.f32.mrf.mxu0
  %v176 = vadd.f32 0.0, %v175
  %177 = vmatmul.bf16.gmra.mxu0 %v81
  %v178 = vpop.f32.mrf.mxu0
  %v179 = vadd.f32 0.0, %v178
  %v180 = vpop.f32.mrf.mxu0
  %v181 = vadd.f32 0.0, %v180
  %182 = vmatmul.bf16.gmra.mxu0 %v82
  %v183 = vpop.f32.mrf.mxu0
  %v184 = vadd.f32 0.0, %v183
  %v185 = vpop.f32.mrf.mxu0
  %v186 = vadd.f32 0.0, %v185
  %187 = vdwg.mxu0
  %v188 = vpack.c.bf16 %v149, %v149
  %v189 = vpack.c.bf16 %v151, %v151
  %v190 = vpack.c.bf16 %v154, %v154
  %v191 = vpack.c.bf16 %v156, %v156
  %v192 = vpack.c.bf16 %v159, %v159
  %v193 = vpack.c.bf16 %v161, %v161
  %v194 = vpack.c.bf16 %v164, %v164
  %v195 = vpack.c.bf16 %v166, %v166
  %v196 = vpack.c.bf16 %v169, %v169
  %v197 = vpack.c.bf16 %v171, %v171
  %v198 = vpack.c.bf16 %v174, %v174
  %v199 = vpack.c.bf16 %v176, %v176
  %v200 = vpack.c.bf16 %v179, %v179
  %v201 = vpack.c.bf16 %v181, %v181
  %v202 = vpack.c.bf16 %v184, %v184
  %v203 = vpack.c.bf16 %v186, %v186
  %204 = vst [vmem:[%s2] sm:$0xf] %v188
  %205 = vst [vmem:[%s2 + $0x4] sm:$0xf] %v189
  %206 = vst [vmem:[%s2 + $0x8] sm:$0xf] %v190
  %207 = vst [vmem:[%s2 + $0xc] sm:$0xf] %v191
  %208 = vst [vmem:[%s2 + $0x10] sm:$0xf] %v192
  %209 = vst [vmem:[%s2 + $0x14] sm:$0xf] %v193
  %210 = vst [vmem:[%s2 + $0x18] sm:$0xf] %v194
  %211 = vst [vmem:[%s2 + $0x1c] sm:$0xf] %v195
  %212 = vst [vmem:[%s2 + $0x20] sm:$0xf] %v196
  %213 = vst [vmem:[%s2 + $0x24] sm:$0xf] %v197
  %214 = vst [vmem:[%s2 + $0x28] sm:$0xf] %v198
  %215 = vst [vmem:[%s2 + $0x2c] sm:$0xf] %v199
  %216 = vst [vmem:[%s2 + $0x30] sm:$0xf] %v200
  %217 = vst [vmem:[%s2 + $0x34] sm:$0xf] %v201
  %218 = vst [vmem:[%s2 + $0x38] sm:$0xf] %v202
  %219 = vst [vmem:[%s2 + $0x3c] sm:$0xf] %v203
  // Predicated region
  $region10: #{gcn_layer.2} parent=0 // pred_check
    _
  $region11: #{gcn_layer.2} parent=0 // pred_check_branch
    %221 = sbr.rel (0) target = $region13
  $region12: #{gcn_layer.2} parent=0 // pred_region
    _
  $region13: #{gcn_layer.2} parent=0 // pred_fallthru
    _
  // Predicated region
  $region14: #{gcn_layer.2} parent=0 // pred_check
    _
  $region15: #{gcn_layer.2} parent=0 // pred_check_branch
    %223 = sbr.rel (0) target = $region17
  $region16: #{gcn_layer.2} parent=0 // pred_region
    _
  $region17: #{gcn_layer.2} parent=0 // pred_fallthru
    _

// kernel: gcn_layer.3
$region0: #{gcn_layer.3}
  #allocation0 [shape = 'u32[]', space=smem, size = 0x4, offset = 0x4, fixed_abs, tag = 'smem constant byte address 0x4 - core index']
  #allocation1 [shape = 'u32[72,128]{1,0:T(1,128)}', space=vmem, size = 0x9000, scoped, tag = 'internal scratch']
  #allocation2 [shape = 'f32[128,128]{1,0:T(8,128)}', space=vmem, size = 0x10000, scoped, tag = 'scratch operand']
  %s0 = inlined_call_operand.vmem [shape: bf16[128,128], index: 0, kind: input, shape index: {}]
  %s1 = inlined_call_operand.vmem [shape: bf16[128,128], index: 1, kind: input, shape index: {}]
  %s2 = inlined_call_operand.vmem [shape: f32[128,128], index: 2, kind: output, shape index: {}]
  %s3 = sld [smem:[#allocation0]]
  $region26: #{gcn_layer.3} parent=0
    _
  %s5 = ssub.s32 1, %s3
  %s6 = scalar_select 0, %s5, %s3
  // Predicated region
  $region2: #{gcn_layer.3} parent=0 // pred_check
    _
  $region3: #{gcn_layer.3} parent=0 // pred_check_branch
    %8 = sbr.rel (0) target = $region5
  $region4: #{gcn_layer.3} parent=0 // pred_region
    _
  $region5: #{gcn_layer.3} parent=0 // pred_fallthru
    _
  // Predicated region
  $region6: #{gcn_layer.3} parent=0 // pred_check
    _
  $region7: #{gcn_layer.3} parent=0 // pred_check_branch
    %10 = sbr.rel (0) target = $region9
  $region8: #{gcn_layer.3} parent=0 // pred_region
    _
  $region9: #{gcn_layer.3} parent=0 // pred_fallthru
    _
  %p11 = scmp.eq.s32.totalorder 0, 0
  // Predicated region
  $region10: #{gcn_layer.3} parent=0 // pred_check
    %p12 = pneg %p11
  $region11: #{gcn_layer.3} parent=0 // pred_check_branch
    %14 = sbr.rel (%p12) target = $region13
  $region12: #{gcn_layer.3} parent=0 // pred_region
    %15 = vst [vmem:[#allocation2] sm:$0xff] 0.0
    %16 = vst [vmem:[#allocation2 + $0x8] sm:$0xff] 0.0
    %17 = vst [vmem:[#allocation2 + $0x10] sm:$0xff] 0.0
    %18 = vst [vmem:[#allocation2 + $0x18] sm:$0xff] 0.0
    %19 = vst [vmem:[#allocation2 + $0x20] sm:$0xff] 0.0
    %20 = vst [vmem:[#allocation2 + $0x28] sm:$0xff] 0.0
    %21 = vst [vmem:[#allocation2 + $0x30] sm:$0xff] 0.0
    %22 = vst [vmem:[#allocation2 + $0x38] sm:$0xff] 0.0
    %23 = vst [vmem:[#allocation2 + $0x40] sm:$0xff] 0.0
    %24 = vst [vmem:[#allocation2 + $0x48] sm:$0xff] 0.0
    %25 = vst [vmem:[#allocation2 + $0x50] sm:$0xff] 0.0
    %26 = vst [vmem:[#allocation2 + $0x58] sm:$0xff] 0.0
    %27 = vst [vmem:[#allocation2 + $0x60] sm:$0xff] 0.0
    %28 = vst [vmem:[#allocation2 + $0x68] sm:$0xff] 0.0
    %29 = vst [vmem:[#allocation2 + $0x70] sm:$0xff] 0.0
    %30 = vst [vmem:[#allocation2 + $0x78] sm:$0xff] 0.0
  $region13: #{gcn_layer.3} parent=0 // pred_fallthru
    _
  %v31 = vld [vmem:[#allocation2] sm:$0xff]
  %v32 = vld [vmem:[#allocation2 + $0x8] sm:$0xff]
  %v33 = vld [vmem:[#allocation2 + $0x10] sm:$0xff]
  %v34 = vld [vmem:[#allocation2 + $0x18] sm:$0xff]
  %v35 = vld [vmem:[#allocation2 + $0x20] sm:$0xff]
  %v36 = vld [vmem:[#allocation2 + $0x28] sm:$0xff]
  %v37 = vld [vmem:[#allocation2 + $0x30] sm:$0xff]
  %v38 = vld [vmem:[#allocation2 + $0x38] sm:$0xff]
  %v39 = vld [vmem:[#allocation2 + $0x40] sm:$0xff]
  %v40 = vld [vmem:[#allocation2 + $0x48] sm:$0xff]
  %v41 = vld [vmem:[#allocation2 + $0x50] sm:$0xff]
  %v42 = vld [vmem:[#allocation2 + $0x58] sm:$0xff]
  %v43 = vld [vmem:[#allocation2 + $0x60] sm:$0xff]
  %v44 = vld [vmem:[#allocation2 + $0x68] sm:$0xff]
  %v45 = vld [vmem:[#allocation2 + $0x70] sm:$0xff]
  %v46 = vld [vmem:[#allocation2 + $0x78] sm:$0xff]
  %v47 = vld [vmem:[%s0] sm:$0xf]
  %v48 = vld [vmem:[%s0 + $0x4] sm:$0xf]
  %v49 = vld [vmem:[%s0 + $0x8] sm:$0xf]
  %v50 = vld [vmem:[%s0 + $0xc] sm:$0xf]
  %v51 = vld [vmem:[%s0 + $0x10] sm:$0xf]
  %v52 = vld [vmem:[%s0 + $0x14] sm:$0xf]
  %v53 = vld [vmem:[%s0 + $0x18] sm:$0xf]
  %v54 = vld [vmem:[%s0 + $0x1c] sm:$0xf]
  %v55 = vld [vmem:[%s0 + $0x20] sm:$0xf]
  %v56 = vld [vmem:[%s0 + $0x24] sm:$0xf]
  %v57 = vld [vmem:[%s0 + $0x28] sm:$0xf]
  %v58 = vld [vmem:[%s0 + $0x2c] sm:$0xf]
  %v59 = vld [vmem:[%s0 + $0x30] sm:$0xf]
  %v60 = vld [vmem:[%s0 + $0x34] sm:$0xf]
  %v61 = vld [vmem:[%s0 + $0x38] sm:$0xf]
  %v62 = vld [vmem:[%s0 + $0x3c] sm:$0xf]
  %v63 = vld [vmem:[%s1] sm:$0xf]
  %v64 = vld [vmem:[%s1 + $0x4] sm:$0xf]
  %v65 = vld [vmem:[%s1 + $0x8] sm:$0xf]
  %v66 = vld [vmem:[%s1 + $0xc] sm:$0xf]
  %v67 = vld [vmem:[%s1 + $0x10] sm:$0xf]
  %v68 = vld [vmem:[%s1 + $0x14] sm:$0xf]
  %v69 = vld [vmem:[%s1 + $0x18] sm:$0xf]
  %v70 = vld [vmem:[%s1 + $0x1c] sm:$0xf]
  %v71 = vld [vmem:[%s1 + $0x20] sm:$0xf]
  %v72 = vld [vmem:[%s1 + $0x24] sm:$0xf]
  %v73 = vld [vmem:[%s1 + $0x28] sm:$0xf]
  %v74 = vld [vmem:[%s1 + $0x2c] sm:$0xf]
  %v75 = vld [vmem:[%s1 + $0x30] sm:$0xf]
  %v76 = vld [vmem:[%s1 + $0x34] sm:$0xf]
  %v77 = vld [vmem:[%s1 + $0x38] sm:$0xf]
  %v78 = vld [vmem:[%s1 + $0x3c] sm:$0xf]
  %v95 = vunpack.c.l.b16 %v47
  %v96 = vunpack.c.l.b16 %v48
  %v97 = vunpack.c.l.b16 %v49
  %v98 = vunpack.c.l.b16 %v50
  %v99 = vunpack.c.l.b16 %v51
  %v100 = vunpack.c.l.b16 %v52
  %v101 = vunpack.c.l.b16 %v53
  %v102 = vunpack.c.l.b16 %v54
  %v103 = vunpack.c.l.b16 %v55
  %v104 = vunpack.c.l.b16 %v56
  %v105 = vunpack.c.l.b16 %v57
  %v106 = vunpack.c.l.b16 %v58
  %v107 = vunpack.c.l.b16 %v59
  %v108 = vunpack.c.l.b16 %v60
  %v109 = vunpack.c.l.b16 %v61
  %v110 = vunpack.c.l.b16 %v62
  %v111 = vpack.c.b16 %v96, %v95
  %v112 = vpack.c.b16 %v98, %v97
  %v113 = vpack.c.b16 %v100, %v99
  %v114 = vpack.c.b16 %v102, %v101
  %v115 = vpack.c.b16 %v104, %v103
  %v116 = vpack.c.b16 %v106, %v105
  %v117 = vpack.c.b16 %v108, %v107
  %v118 = vpack.c.b16 %v110, %v109
  %v143 = vunpack.c.l.b16 %v63
  %v144 = vunpack.c.l.b16 %v64
  %v145 = vunpack.c.l.b16 %v65
  %v146 = vunpack.c.l.b16 %v66
  %v147 = vunpack.c.l.b16 %v67
  %v148 = vunpack.c.l.b16 %v68
  %v149 = vunpack.c.l.b16 %v69
  %v150 = vunpack.c.l.b16 %v70
  %v151 = vunpack.c.l.b16 %v71
  %v152 = vunpack.c.l.b16 %v72
  %v153 = vunpack.c.l.b16 %v73
  %v154 = vunpack.c.l.b16 %v74
  %v155 = vunpack.c.l.b16 %v75
  %v156 = vunpack.c.l.b16 %v76
  %v157 = vunpack.c.l.b16 %v77
  %v158 = vunpack.c.l.b16 %v78
  %v159 = vpack.c.b16 %v144, %v143
  %v160 = vpack.c.b16 %v146, %v145
  %v161 = vpack.c.b16 %v148, %v147
  %v162 = vpack.c.b16 %v150, %v149
  %v163 = vpack.c.b16 %v152, %v151
  %v164 = vpack.c.b16 %v154, %v153
  %v165 = vpack.c.b16 %v156, %v155
  %v166 = vpack.c.b16 %v158, %v157
  %175 = vmatpush.bf16.msra.mxu0 %v166
  %176 = vmatpush.bf16.msra.mxu0 %v165
  %177 = vmatpush.bf16.msra.mxu0 %v164
  %178 = vmatpush.bf16.msra.mxu0 %v163
  %179 = vmatpush.bf16.msra.mxu0 %v162
  %180 = vmatpush.bf16.msra.mxu0 %v161
  %181 = vmatpush.bf16.msra.mxu0 %v160
  %182 = vmatpush.bf16.msra.mxu0 %v159
  %183 = vmatmul.bf16.gmra.mxu0 %v111
  %v184 = vpop.f32.mrf.mxu0
  %v185 = vadd.f32 0.0, %v184
  %v186 = vpop.f32.mrf.mxu0
  %v187 = vadd.f32 0.0, %v186
  %188 = vmatmul.bf16.gmra.mxu0 %v112
  %v189 = vpop.f32.mrf.mxu0
  %v190 = vadd.f32 0.0, %v189
  %v191 = vpop.f32.mrf.mxu0
  %v192 = vadd.f32 0.0, %v191
  %193 = vmatmul.bf16.gmra.mxu0 %v113
  %v194 = vpop.f32.mrf.mxu0
  %v195 = vadd.f32 0.0, %v194
  %v196 = vpop.f32.mrf.mxu0
  %v197 = vadd.f32 0.0, %v196
  %198 = vmatmul.bf16.gmra.mxu0 %v114
  %v199 = vpop.f32.mrf.mxu0
  %v200 = vadd.f32 0.0, %v199
  %v201 = vpop.f32.mrf.mxu0
  %v202 = vadd.f32 0.0, %v201
  %203 = vmatmul.bf16.gmra.mxu0 %v115
  %v204 = vpop.f32.mrf.mxu0
  %v205 = vadd.f32 0.0, %v204
  %v206 = vpop.f32.mrf.mxu0
  %v207 = vadd.f32 0.0, %v206
  %208 = vmatmul.bf16.gmra.mxu0 %v116
  %v209 = vpop.f32.mrf.mxu0
  %v210 = vadd.f32 0.0, %v209
  %v211 = vpop.f32.mrf.mxu0
  %v212 = vadd.f32 0.0, %v211
  %213 = vmatmul.bf16.gmra.mxu0 %v117
  %v214 = vpop.f32.mrf.mxu0
  %v215 = vadd.f32 0.0, %v214
  %v216 = vpop.f32.mrf.mxu0
  %v217 = vadd.f32 0.0, %v216
  %218 = vmatmul.bf16.gmra.mxu0 %v118
  %v219 = vpop.f32.mrf.mxu0
  %v220 = vadd.f32 0.0, %v219
  %v221 = vpop.f32.mrf.mxu0
  %v222 = vadd.f32 0.0, %v221
  %223 = vdwg.mxu0
  %v224 = vadd.f32 %v31, %v185
  %v225 = vadd.f32 %v32, %v187
  %v226 = vadd.f32 %v33, %v190
  %v227 = vadd.f32 %v34, %v192
  %v228 = vadd.f32 %v35, %v195
  %v229 = vadd.f32 %v36, %v197
  %v230 = vadd.f32 %v37, %v200
  %v231 = vadd.f32 %v38, %v202
  %v232 = vadd.f32 %v39, %v205
  %v233 = vadd.f32 %v40, %v207
  %v234 = vadd.f32 %v41, %v210
  %v235 = vadd.f32 %v42, %v212
  %v236 = vadd.f32 %v43, %v215
  %v237 = vadd.f32 %v44, %v217
  %v238 = vadd.f32 %v45, %v220
  %v239 = vadd.f32 %v46, %v222
  %240 = vst [vmem:[#allocation2] sm:$0xff] %v224
  %241 = vst [vmem:[#allocation2 + $0x8] sm:$0xff] %v225
  %242 = vst [vmem:[#allocation2 + $0x10] sm:$0xff] %v226
  %243 = vst [vmem:[#allocation2 + $0x18] sm:$0xff] %v227
  %244 = vst [vmem:[#allocation2 + $0x20] sm:$0xff] %v228
  %245 = vst [vmem:[#allocation2 + $0x28] sm:$0xff] %v229
  %246 = vst [vmem:[#allocation2 + $0x30] sm:$0xff] %v230
  %247 = vst [vmem:[#allocation2 + $0x38] sm:$0xff] %v231
  %248 = vst [vmem:[#allocation2 + $0x40] sm:$0xff] %v232
  %249 = vst [vmem:[#allocation2 + $0x48] sm:$0xff] %v233
  %250 = vst [vmem:[#allocation2 + $0x50] sm:$0xff] %v234
  %251 = vst [vmem:[#allocation2 + $0x58] sm:$0xff] %v235
  %252 = vst [vmem:[#allocation2 + $0x60] sm:$0xff] %v236
  %253 = vst [vmem:[#allocation2 + $0x68] sm:$0xff] %v237
  %254 = vst [vmem:[#allocation2 + $0x70] sm:$0xff] %v238
  %255 = vst [vmem:[#allocation2 + $0x78] sm:$0xff] %v239
  // Predicated region
  $region14: #{gcn_layer.3} parent=0 // pred_check
    %p256 = pneg %p11
  $region15: #{gcn_layer.3} parent=0 // pred_check_branch
    %258 = sbr.rel (%p256) target = $region17
  $region16: #{gcn_layer.3} parent=0 // pred_region
    %v259 = vld [vmem:[#allocation2] sm:$0xff]
    %v260 = vld [vmem:[#allocation2 + $0x8] sm:$0xff]
    %v261 = vld [vmem:[#allocation2 + $0x10] sm:$0xff]
    %v262 = vld [vmem:[#allocation2 + $0x18] sm:$0xff]
    %v263 = vld [vmem:[#allocation2 + $0x20] sm:$0xff]
    %v264 = vld [vmem:[#allocation2 + $0x28] sm:$0xff]
    %v265 = vld [vmem:[#allocation2 + $0x30] sm:$0xff]
    %v266 = vld [vmem:[#allocation2 + $0x38] sm:$0xff]
    %v267 = vld [vmem:[#allocation2 + $0x40] sm:$0xff]
    %v268 = vld [vmem:[#allocation2 + $0x48] sm:$0xff]
    %v269 = vld [vmem:[#allocation2 + $0x50] sm:$0xff]
    %v270 = vld [vmem:[#allocation2 + $0x58] sm:$0xff]
    %v271 = vld [vmem:[#allocation2 + $0x60] sm:$0xff]
    %v272 = vld [vmem:[#allocation2 + $0x68] sm:$0xff]
    %v273 = vld [vmem:[#allocation2 + $0x70] sm:$0xff]
    %v274 = vld [vmem:[#allocation2 + $0x78] sm:$0xff]
    %275 = vst [vmem:[%s2] sm:$0xff] %v259
    %276 = vst [vmem:[%s2 + $0x8] sm:$0xff] %v260
    %277 = vst [vmem:[%s2 + $0x10] sm:$0xff] %v261
    %278 = vst [vmem:[%s2 + $0x18] sm:$0xff] %v262
    %279 = vst [vmem:[%s2 + $0x20] sm:$0xff] %v263
    %280 = vst [vmem:[%s2 + $0x28] sm:$0xff] %v264
    %281 = vst [vmem:[%s2 + $0x30] sm:$0xff] %v265
    %282 = vst [vmem:[%s2 + $0x38] sm:$0xff] %v266
    %283 = vst [vmem:[%s2 + $0x40] sm:$0xff] %v267
    %284 = vst [vmem:[%s2 + $0x48] sm:$0xff] %v268
    %285 = vst [vmem:[%s2 + $0x50] sm:$0xff] %v269
    %286 = vst [vmem:[%s2 + $0x58] sm:$0xff] %v270
    %287 = vst [vmem:[%s2 + $0x60] sm:$0xff] %v271
    %288 = vst [vmem:[%s2 + $0x68] sm:$0xff] %v272
    %289 = vst [vmem:[%s2 + $0x70] sm:$0xff] %v273
    %290 = vst [vmem:[%s2 + $0x78] sm:$0xff] %v274
  $region17: #{gcn_layer.3} parent=0 // pred_fallthru
    _
  // Predicated region
  $region18: #{gcn_layer.3} parent=0 // pred_check
    _
  $region19: #{gcn_layer.3} parent=0 // pred_check_branch
    %292 = sbr.rel (0) target = $region21
  $region20: #{gcn_layer.3} parent=0 // pred_region
    _
  $region21: #{gcn_layer.3} parent=0 // pred_fallthru
    _
  // Predicated region
  $region22: #{gcn_layer.3} parent=0 // pred_check
    _
  $region23: #{gcn_layer.3} parent=0 // pred_check_branch
    %294 = sbr.rel (0) target = $region25
  $region24: #{gcn_layer.3} parent=0 // pred_region
    _
  $region25: #{gcn_layer.3} parent=0 // pred_fallthru
    _

</llo_original>
